<compile_context>
chip_gen: v5e
topology: v5e:2x2
jax: 0.10.0
libtpu: 0.0.40
codegen_flags: <defaults>
</compile_context>

<pallas_src>
import jax
import jax.numpy as jnp
from jax.experimental import pallas as pl
from jax.experimental.pallas import tpu as pltpu

EPS = 1e-10


def _make_kernel(use_approx_recip):
    def kernel(pred_ref, label_ref, out_ref):
        # pred block:  (TB, 2, TS0, 128)  native dtype
        # label block: (TB, 3, TS0, 128)  native dtype
        # out block:   (1, 2, 8, 128)     f32 partial sums for this grid step
        p0 = pred_ref[:, 0, :, :].astype(jnp.float32)
        p1 = pred_ref[:, 1, :, :].astype(jnp.float32)
        l0 = label_ref[:, 0, :, :].astype(jnp.float32)
        l1 = label_ref[:, 1, :, :].astype(jnp.float32)
        msk = label_ref[:, 2, :, :].astype(jnp.float32)

        # |p/(l+eps) - l/(l+eps)| == |(p - l) / (l + eps)|  -> half the divides.
        if use_approx_recip:
            # EUP slot is otherwise idle; bf16 inputs already carry >=1e-3 noise.
            d0 = (p0 - l0) * pl.reciprocal(l0 + EPS, approx=True)
            d1 = (p1 - l1) * pl.reciprocal(l1 + EPS, approx=True)
        else:
            d0 = (p0 - l0) / (l0 + EPS)
            d1 = (p1 - l1) / (l1 + EPS)
        loss = msk * (jnp.abs(d0) + jnp.abs(d1))

        loss_sum = jnp.sum(loss)
        mask_sum = jnp.sum(msk)

        out_ref[0, 0, :, :] = jnp.full((8, 128), loss_sum, dtype=jnp.float32)
        out_ref[0, 1, :, :] = jnp.full((8, 128), mask_sum, dtype=jnp.float32)

    return kernel


def _divisors(n):
    return [d for d in range(1, n + 1) if n % d == 0]


def _select_tiles(n_batch, s0, bytes_per_cell, target_bytes, inputs_budget):
    """Pick (tb, ts0) batch/spatial tile sizes.

    Preference order:
      1. at least 2 grid steps (keeps both v7x TensorCores busy),
      2. combined (pred+label) block as close to, but not above, target_bytes,
      3. fewer grid steps (less fixed per-step overhead).
    Double-buffered input blocks must fit in `inputs_budget`.
    """
    best, best_key = None, None
    for tb in _divisors(n_batch):
        for ts0 in _divisors(s0):
            if ts0 != s0 and ts0 % 8 != 0:
                continue  # spatial tiles must be sublane (8) aligned unless full-extent
            blk = tb * ts0 * bytes_per_cell
            if 2 * blk > inputs_budget:
                continue  # double-buffered inputs must fit in VMEM
            steps = (n_batch // tb) * (s0 // ts0)
            size_score = blk if blk <= target_bytes else 2 * target_bytes - blk
            key = (1 if steps >= 2 else 0, size_score, -steps)
            if best_key is None or key > best_key:
                best_key, best = key, (tb, ts0)
    return best


def reg_hw_pos(h_pred, h_label):
    """Pallas implementation of the reg_hw_pos forward pass. Returns a scalar."""
    N, Cp, H, W = h_pred.shape
    Nl, Cl, Hl, Wl = h_label.shape
    assert (N, H, W) == (Nl, Hl, Wl) and Cp >= 2 and Cl >= 3

    # Only channels 0..1 of pred and 0..2 of label are used (no-op slice when exact).
    pred = h_pred[:, :2]
    label = h_label[:, :3]

    L = H * W
    # Lane-dense layout: (N, C, H, W) -> (N, C, s0, 128). Zero-pad the flattened
    # spatial axis to a multiple of 8*128 when H*W is not a multiple of 128.
    L_pad = L if L % 128 == 0 else -(-L // 1024) * 1024

    # Generation-aware VMEM budget / block-size target.
    try:
        info = pltpu.get_tpu_info()
        vmem_cap = int(getattr(info, "vmem_capacity_bytes", 64 * 1024 * 1024))
    except Exception:  # pragma: no cover - conservative fallback
        vmem_cap = 64 * 1024 * 1024
    if not vmem_cap or vmem_cap < 32 * 1024 * 1024:
        vmem_cap = 64 * 1024 * 1024
    # v7x (64 MiB/TC, ~3.2 TB/s/TC) wants bigger blocks to amortize the per-step cost;
    # v5e/v6e (128 MiB) are happy at ~8 MiB.
    target_bytes = 12 * 1024 * 1024 if vmem_cap <= 64 * 1024 * 1024 else 8 * 1024 * 1024
    inputs_budget = (vmem_cap * 3) // 5  # headroom for outputs / compiler scratch

    bytes_per_cell = 128 * (2 * pred.dtype.itemsize + 3 * label.dtype.itemsize)

    s0 = L_pad // 128
    sel = _select_tiles(N, s0, bytes_per_cell, target_bytes, inputs_budget)
    if sel is None:
        # No sublane-aligned divisor of s0 gives a VMEM-fitting block: pad the spatial
        # axis to a multiple of 8*128 so ts0=8 is always available.
        L_pad = -(-L // 1024) * 1024
        s0 = L_pad // 128
        sel = _select_tiles(N, s0, bytes_per_cell, target_bytes, inputs_budget)
    assert sel is not None, "could not find a VMEM-fitting tiling"
    tb, ts0 = sel

    def _layout(x, c):
        x = x.reshape(N, c, L)
        if L_pad != L:
            x = jnp.pad(x, ((0, 0), (0, 0), (0, L_pad - L)))
        return x.reshape(N, c, s0, 128)

    pred = _layout(pred, 2)
    label = _layout(label, 3)

    nb_b, nb_s = N // tb, s0 // ts0
    nsteps = nb_b * nb_s

    blk_bytes = tb * ts0 * bytes_per_cell
    out_bytes = 2 * 8 * 128 * 4
    vmem_limit = int(min(max(2 * blk_bytes + 2 * out_bytes + (2 << 20), 16 << 20),
                         vmem_cap - (4 << 20)))

    cost = pl.CostEstimate(
        flops=int(12 * N * L_pad),
        transcendentals=int(2 * N * L_pad),
        bytes_accessed=int(pred.size * pred.dtype.itemsize
                           + label.size * label.dtype.itemsize
                           + nsteps * out_bytes),
    )

    # Exact divide for f32 inputs (reference parity); approx EUP reciprocal otherwise.
    use_approx = pred.dtype.itemsize < 4 or label.dtype.itemsize < 4

    parts = pl.pallas_call(
        _make_kernel(use_approx),
        out_shape=jax.ShapeDtypeStruct((nsteps, 2, 8, 128), jnp.float32),
        grid_spec=pltpu.PrefetchScalarGridSpec(
            num_scalar_prefetch=0,
            grid=(nb_b, nb_s),
            in_specs=[
                pl.BlockSpec((tb, 2, ts0, 128), lambda b, s: (b, 0, s, 0)),
                pl.BlockSpec((tb, 3, ts0, 128), lambda b, s: (b, 0, s, 0)),
            ],
            out_specs=pl.BlockSpec((1, 2, 8, 128),
                                   lambda b, s: (b * nb_s + s, 0, 0, 0)),
        ),
        compiler_params=pltpu.CompilerParams(
            dimension_semantics=("parallel", "parallel"),  # independent tiles
            vmem_limit_bytes=vmem_limit,
        ),
        cost_estimate=cost,
    )(pred, label)

    loss_sum = jnp.sum(parts[:, 0, 0, 0])
    mask_sum = jnp.sum(parts[:, 1, 0, 0])
    return loss_sum / jnp.maximum(jnp.float32(1.0), mask_sum * 2.0)


def _reference(h_pred, h_label):
    l0 = h_label[:, 0, :, :]
    l1 = h_label[:, 1, :, :]
    msk = h_label[:, 2, :, :]
    p0 = h_pred[:, 0, :, :]
    p1 = h_pred[:, 1, :, :]
    l1_loss = msk * jnp.abs(p0 / (l0 + EPS) - l0 / (l0 + EPS))
    l1_loss = l1_loss + msk * jnp.abs(p1 / (l1 + EPS) - l1 / (l1 + EPS))
    return jnp.sum(l1_loss) / jnp.maximum(1.0, jnp.sum(msk) * 2.0)


if __name__ == "__main__":
    key = jax.random.PRNGKey(0)
    k1, k2, k3 = jax.random.split(key, 3)

    N, H, W = 2, 16, 16
    # Predictions: 2 channels (height, width).
    h_pred = jax.random.normal(k1, (N, 2, H, W), dtype=jnp.float32)
    # Labels: channels 0/1 are positive-valued targets, channel 2 is a binary mask.
    targets = jax.random.uniform(k2, (N, 2, H, W), dtype=jnp.float32, minval=0.1, maxval=2.0)
    mask = (jax.random.uniform(k3, (N, 1, H, W), dtype=jnp.float32) > 0.7).astype(jnp.float32)
    h_label = jnp.concatenate([targets, mask], axis=1)  # (N, 3, H, W)

    out = jax.block_until_ready(reg_hw_pos(h_pred, h_label))
    ref = jax.block_until_ready(_reference(h_pred, h_label))
    assert jnp.allclose(out, ref, rtol=1e-5, atol=1e-5), (out, ref)

    # Non-128-divisible spatial extent exercises the zero-padded lane-dense path.
    Ho, Wo = 10, 9
    hp_o = jax.random.normal(k1, (N, 2, Ho, Wo), dtype=jnp.float32)
    tg_o = jax.random.uniform(k2, (N, 2, Ho, Wo), dtype=jnp.float32, minval=0.1, maxval=2.0)
    mk_o = (jax.random.uniform(k3, (N, 1, Ho, Wo), dtype=jnp.float32) > 0.7).astype(jnp.float32)
    hl_o = jnp.concatenate([tg_o, mk_o], axis=1)
    out_o = jax.block_until_ready(reg_hw_pos(hp_o, hl_o))
    ref_o = jax.block_until_ready(_reference(hp_o, hl_o))
    assert jnp.allclose(out_o, ref_o, rtol=1e-5, atol=1e-5), (out_o, ref_o)

    # Native-dtype (bf16) path: loads bf16, casts per-block, uses EUP approx reciprocal.
    hp_bf = h_pred.astype(jnp.bfloat16)
    hl_bf = h_label.astype(jnp.bfloat16)
    out_bf = jax.block_until_ready(reg_hw_pos(hp_bf, hl_bf))
    ref_bf = jax.block_until_ready(
        _reference(hp_bf.astype(jnp.float32), hl_bf.astype(jnp.float32)))
    assert jnp.allclose(out_bf, ref_bf, rtol=5e-3, atol=5e-3), (out_bf, ref_bf)

    print("KERNEL_OK")
</pallas_src>

<mosaic_0001>
module attributes {stable_mosaic.version = 11 : i64} {
  func.func @kernel(%arg0: i32, %arg1: i32, %arg2: memref<1x2x2x128xf32, #tpu.memory_space<vmem>>, %arg3: memref<1x3x2x128xf32, #tpu.memory_space<vmem>>, %arg4: memref<1x2x8x128xf32, #tpu.memory_space<vmem>>) attributes {dimension_semantics = [#tpu.dimension_semantics<parallel>, #tpu.dimension_semantics<parallel>], iteration_bounds = array<i64: 2, 1>, scalar_prefetch = 0 : i64, scratch_operands = 0 : i64, tpu.core_type = #tpu.core_type<tc>, window_params = [{transform_indices = @transform_0, window_bounds = array<i64: 1, 2, 2, 128>}, {transform_indices = @transform_1, window_bounds = array<i64: 1, 3, 2, 128>}, {transform_indices = @transform_2, window_bounds = array<i64: 1, 2, 8, 128>}]} {
    %c0 = arith.constant 0 : index
    %c0_0 = arith.constant 0 : index
    %c0_1 = arith.constant 0 : index
    %c0_2 = arith.constant 0 : index
    %0 = vector.load %arg2[%c0, %c0_0, %c0_1, %c0_2] : memref<1x2x2x128xf32, #tpu.memory_space<vmem>>, vector<1x1x2x128xf32>
    %1 = vector.shape_cast %0 : vector<1x1x2x128xf32> to vector<1x2x128xf32>
    %c0_3 = arith.constant 0 : index
    %c1 = arith.constant 1 : index
    %c0_4 = arith.constant 0 : index
    %c0_5 = arith.constant 0 : index
    %2 = vector.load %arg2[%c0_3, %c1, %c0_4, %c0_5] : memref<1x2x2x128xf32, #tpu.memory_space<vmem>>, vector<1x1x2x128xf32>
    %3 = vector.shape_cast %2 : vector<1x1x2x128xf32> to vector<1x2x128xf32>
    %c0_6 = arith.constant 0 : index
    %c0_7 = arith.constant 0 : index
    %c0_8 = arith.constant 0 : index
    %c0_9 = arith.constant 0 : index
    %4 = vector.load %arg3[%c0_6, %c0_7, %c0_8, %c0_9] : memref<1x3x2x128xf32, #tpu.memory_space<vmem>>, vector<1x1x2x128xf32>
    %5 = vector.shape_cast %4 : vector<1x1x2x128xf32> to vector<1x2x128xf32>
    %c0_10 = arith.constant 0 : index
    %c1_11 = arith.constant 1 : index
    %c0_12 = arith.constant 0 : index
    %c0_13 = arith.constant 0 : index
    %6 = vector.load %arg3[%c0_10, %c1_11, %c0_12, %c0_13] : memref<1x3x2x128xf32, #tpu.memory_space<vmem>>, vector<1x1x2x128xf32>
    %7 = vector.shape_cast %6 : vector<1x1x2x128xf32> to vector<1x2x128xf32>
    %c0_14 = arith.constant 0 : index
    %c2 = arith.constant 2 : index
    %c0_15 = arith.constant 0 : index
    %c0_16 = arith.constant 0 : index
    %8 = vector.load %arg3[%c0_14, %c2, %c0_15, %c0_16] : memref<1x3x2x128xf32, #tpu.memory_space<vmem>>, vector<1x1x2x128xf32>
    %9 = vector.shape_cast %8 : vector<1x1x2x128xf32> to vector<1x2x128xf32>
    %10 = arith.subf %1, %5 : vector<1x2x128xf32>
    %cst = arith.constant 1.000000e-10 : f32
    %11 = vector.broadcast %cst : f32 to vector<1x2x128xf32>
    %12 = arith.addf %5, %11 : vector<1x2x128xf32>
    %13 = arith.divf %10, %12 : vector<1x2x128xf32>
    %14 = arith.subf %3, %7 : vector<1x2x128xf32>
    %cst_17 = arith.constant 1.000000e-10 : f32
    %15 = vector.broadcast %cst_17 : f32 to vector<1x2x128xf32>
    %16 = arith.addf %7, %15 : vector<1x2x128xf32>
    %17 = arith.divf %14, %16 : vector<1x2x128xf32>
    %18 = math.absf %13 : vector<1x2x128xf32>
    %19 = math.absf %17 : vector<1x2x128xf32>
    %20 = arith.addf %18, %19 : vector<1x2x128xf32>
    %21 = arith.mulf %9, %20 : vector<1x2x128xf32>
    %22 = vector.shape_cast %21 : vector<1x2x128xf32> to vector<1x1x2x128xf32>
    %cst_18 = arith.constant dense<0.000000e+00> : vector<1xf32>
    %23 = vector.multi_reduction <add>, %22, %cst_18 [1, 2, 3] : vector<1x1x2x128xf32> to vector<1xf32>
    %24 = vector.shape_cast %23 : vector<1xf32> to vector<1x1x1x1xf32>
    %25 = vector.extract %24[0, 0, 0, 0] : f32 from vector<1x1x1x1xf32>
    %26 = vector.shape_cast %9 : vector<1x2x128xf32> to vector<1x1x2x128xf32>
    %cst_19 = arith.constant dense<0.000000e+00> : vector<1xf32>
    %27 = vector.multi_reduction <add>, %26, %cst_19 [1, 2, 3] : vector<1x1x2x128xf32> to vector<1xf32>
    %28 = vector.shape_cast %27 : vector<1xf32> to vector<1x1x1x1xf32>
    %29 = vector.extract %28[0, 0, 0, 0] : f32 from vector<1x1x1x1xf32>
    %30 = vector.broadcast %25 : f32 to vector<8x128xf32>
    %c0_20 = arith.constant 0 : index
    %c0_21 = arith.constant 0 : index
    %c0_22 = arith.constant 0 : index
    %c0_23 = arith.constant 0 : index
    %31 = vector.load %arg4[%c0_20, %c0_21, %c0_22, %c0_23] : memref<1x2x8x128xf32, #tpu.memory_space<vmem>>, vector<1x1x8x128xf32>
    %32 = vector.shape_cast %31 : vector<1x1x8x128xf32> to vector<8x128xf32>
    %33 = vector.shape_cast %30 : vector<8x128xf32> to vector<1x1x8x128xf32>
    tpu.vector_store %arg4[%c0_20, %c0_21, %c0_22, %c0_23], %33 {strides = array<i32>} : memref<1x2x8x128xf32, #tpu.memory_space<vmem>>, vector<1x1x8x128xf32>,
    %34 = vector.broadcast %29 : f32 to vector<8x128xf32>
    %c0_24 = arith.constant 0 : index
    %c1_25 = arith.constant 1 : index
    %c0_26 = arith.constant 0 : index
    %c0_27 = arith.constant 0 : index
    %35 = vector.load %arg4[%c0_24, %c1_25, %c0_26, %c0_27] : memref<1x2x8x128xf32, #tpu.memory_space<vmem>>, vector<1x1x8x128xf32>
    %36 = vector.shape_cast %35 : vector<1x1x8x128xf32> to vector<8x128xf32>
    %37 = vector.shape_cast %34 : vector<8x128xf32> to vector<1x1x8x128xf32>
    tpu.vector_store %arg4[%c0_24, %c1_25, %c0_26, %c0_27], %37 {strides = array<i32>} : memref<1x2x8x128xf32, #tpu.memory_space<vmem>>, vector<1x1x8x128xf32>,
    return
  }
  func.func @transform_0(%arg0: i32, %arg1: i32) -> (i32, i32, i32, i32) {
    %c0_i32 = arith.constant 0 : i32
    %c0_i32_0 = arith.constant 0 : i32
    %c0_i32_1 = arith.constant 0 : i32
    return %arg0, %c0_i32, %arg1, %c0_i32_0 : i32, i32, i32, i32
  }
  func.func @transform_1(%arg0: i32, %arg1: i32) -> (i32, i32, i32, i32) {
    %c0_i32 = arith.constant 0 : i32
    %c0_i32_0 = arith.constant 0 : i32
    %c0_i32_1 = arith.constant 0 : i32
    return %arg0, %c0_i32, %arg1, %c0_i32_0 : i32, i32, i32, i32
  }
  func.func @transform_2(%arg0: i32, %arg1: i32) -> (i32, i32, i32, i32) {
    %c1_i32 = arith.constant 1 : i32
    %0 = arith.muli %arg0, %c1_i32 : i32
    %1 = arith.addi %0, %arg1 : i32
    %c0_i32 = arith.constant 0 : i32
    %c0_i32_0 = arith.constant 0 : i32
    %c0_i32_1 = arith.constant 0 : i32
    %c0_i32_2 = arith.constant 0 : i32
    return %1, %c0_i32, %c0_i32_0, %c0_i32_1 : i32, i32, i32, i32
  }
}

</mosaic_0001>

<llo_original>
// kernel: tpu_custom_call.1
$region0: #{tpu_custom_call.1}
  #allocation0 [shape = 'u32[]', space=smem, size = 0x4, offset = 0x4, fixed_abs, tag = 'smem constant byte address 0x4 - core index']
  #allocation1 [shape = 'u32[72,128]{1,0:T(1,128)}', space=vmem, size = 0x9000, scoped, tag = 'internal scratch']
  %s0 = inlined_call_operand.hbm [shape: f32[2,2,2,128], index: 0, kind: input, shape index: {}]
  %s1 = inlined_call_operand.hbm [shape: f32[2,3,2,128], index: 1, kind: input, shape index: {}]
  %s2 = inlined_call_operand.hbm [shape: f32[2,2,8,128], index: 2, kind: output, shape index: {}]
  %s3 = sld [smem:[#allocation0]]
  $region49: #{tpu_custom_call.1} parent=0
    _
  %s5 = ssub.s32 1, %s3
  %s6 = scalar_select 0, %s5, %s3
  $region1: #{tpu_custom_call.1} parent=0
    #allocation2 [shape = 'u8[4096]{0}', space=vmem, size = 0x1000, scoped, tag = 'input window, operand 0']
    #allocation3 [shape = 's32[2]{0}', space=sflag, size = 0x8, scoped, tag = 'scoped memory for tpu_custom_call.1']
    #allocation4 [shape = 's32[2]{0}', space=sflag, size = 0x8, scoped, tag = 'scoped memory for tpu_custom_call.1']
    #allocation5 [shape = 'u8[6144]{0}', space=vmem, size = 0x1800, scoped, tag = 'input window, operand 1']
    #allocation6 [shape = 's32[2]{0}', space=sflag, size = 0x8, scoped, tag = 'scoped memory for tpu_custom_call.1']
    #allocation7 [shape = 'u8[16384]{0}', space=vmem, size = 0x4000, scoped, tag = 'output window, operand 0']
    %7 = vsyncpa [#allocation3], 0
    %s8 = scalar_lea.sflag [#allocation3], 1
    %9 = vsyncpa %s8, 0
    %10 = vsyncpa [#allocation6], 0
    %s11 = scalar_lea.sflag [#allocation6], 1
    %12 = vsyncpa %s11, 0
    %13 = vsyncpa [#allocation4], 0
    %s14 = scalar_lea.sflag [#allocation4], 1
    %15 = vsyncpa %s14, 0
    loop: start=0, step=1, limit=4
    $region2: #{tpu_custom_call.1} parent=1 // loop_pre_header
      _
    $region3: #{tpu_custom_call.1} parent=1 // loop_header
      %s17 = sphi 0, %s21
      %p18 = scmp.ge.s32.totalorder %s17, 4
      %s24 = sphi 0, %s36
      %s25 = sphi 0, %s32
      %s26 = sphi 0, %s24
      %s27 = sphi 0, %s25
      %s28 = sphi 0, %s26
      %s29 = sphi 0, %s27
      %s41 = sphi 0, %s43
      %s44 = sphi 0, %s41
      %s45 = sphi 0, %s44
      %s61 = sphi 0, %s45
      %s69 = sphi 0, %s71
      %s72 = sphi 0, %s69
      %s73 = sphi 0, %s72
      %s89 = sphi 0, %s73
      %s97 = sphi 0, %s99
      %s100 = sphi 0, %s97
      %s101 = sphi 0, %s100
      %s117 = sphi 0, %s101
    $region4: #{tpu_custom_call.1} parent=1 // loop_header_branch
      %20 = sbr.rel (%p18) target = $region8
    $region5: #{tpu_custom_call.1} parent=1 // loop_body
      %s22 = ssub.s32 %s17, 1
      %s23 = ssub.s32 %s17, 2
      %s30 = sadd.s32 1, %s25
      %p31 = scmp.ge.s32.totalorder %s30, 1
      %s32 = scalar_select %p31, 0, %s30
      %s33 = sadd.s32 1, %s24
      %s34 = scalar_select %p31, %s33, %s24
      %p35 = scmp.ge.s32.totalorder %s34, 2
      %s36 = scalar_select %p35, 0, %s34
      %s37 = ssub.s32 %s24, %s36
      %s38 = ssub.s32 %s25, %s32
      %s39 = sor.u32 %s37, %s38
      %p40 = scmp.eq.s32.totalorder %s39, 0
      %s42 = sadd.s32 %s41, 1
      %s43 = scalar_select %p40, %s41, %s42
      %p46 = pneg %p40
      %p47 = scmp.eq.s32.totalorder %s17, 1
      %p48 = por %p46, %p47
      %p49 = scmp.ne.s32.totalorder %s41, %s44
      %p50 = scmp.eq.s32.totalorder %s17, 0
      %p51 = por %p49, %p50
      %p52 = scmp.ne.s32.totalorder %s41, %s44
      %p53 = scmp.eq.s32.totalorder %s22, 1
      %p54 = por %p52, %p53
      %p55 = scmp.ne.s32.totalorder %s44, %s45
      %p56 = scmp.eq.s32.totalorder %s22, 0
      %p57 = por %p55, %p56
      %p58 = scmp.ne.s32.totalorder %s44, %s45
      %p59 = scmp.eq.s32.totalorder %s23, 1
      %p60 = por %p58, %p59
      %p62 = scmp.ne.s32.totalorder %s45, %s61
      %p63 = scmp.eq.s32.totalorder %s23, 0
      %p64 = por %p62, %p63
      %s65 = ssub.s32 %s24, %s36
      %s66 = ssub.s32 %s25, %s32
      %s67 = sor.u32 %s65, %s66
      %p68 = scmp.eq.s32.totalorder %s67, 0
      %s70 = sadd.s32 %s69, 1
      %s71 = scalar_select %p68, %s69, %s70
      %p74 = pneg %p68
      %p75 = scmp.eq.s32.totalorder %s17, 1
      %p76 = por %p74, %p75
      %p77 = scmp.ne.s32.totalorder %s69, %s72
      %p78 = scmp.eq.s32.totalorder %s17, 0
      %p79 = por %p77, %p78
      %p80 = scmp.ne.s32.totalorder %s69, %s72
      %p81 = scmp.eq.s32.totalorder %s22, 1
      %p82 = por %p80, %p81
      %p83 = scmp.ne.s32.totalorder %s72, %s73
      %p84 = scmp.eq.s32.totalorder %s22, 0
      %p85 = por %p83, %p84
      %p86 = scmp.ne.s32.totalorder %s72, %s73
      %p87 = scmp.eq.s32.totalorder %s23, 1
      %p88 = por %p86, %p87
      %p90 = scmp.ne.s32.totalorder %s73, %s89
      %p91 = scmp.eq.s32.totalorder %s23, 0
      %p92 = por %p90, %p91
      %s93 = sadd.s32 %s24, %s25
      %s94 = sadd.s32 %s36, %s32
      %s95 = ssub.s32 %s93, %s94
      %p96 = scmp.eq.s32.totalorder %s95, 0
      %s98 = sadd.s32 %s97, 1
      %s99 = scalar_select %p96, %s97, %s98
      %p102 = pneg %p96
      %p103 = scmp.eq.s32.totalorder %s17, 1
      %p104 = por %p102, %p103
      %p105 = scmp.ne.s32.totalorder %s97, %s100
      %p106 = scmp.eq.s32.totalorder %s17, 0
      %p107 = por %p105, %p106
      %p108 = scmp.ne.s32.totalorder %s97, %s100
      %p109 = scmp.eq.s32.totalorder %s22, 1
      %p110 = por %p108, %p109
      %p111 = scmp.ne.s32.totalorder %s100, %s101
      %p112 = scmp.eq.s32.totalorder %s22, 0
      %p113 = por %p111, %p112
      %p114 = scmp.ne.s32.totalorder %s100, %s101
      %p115 = scmp.eq.s32.totalorder %s23, 1
      %p116 = por %p114, %p115
      %p118 = scmp.ne.s32.totalorder %s101, %s117
      %p119 = scmp.eq.s32.totalorder %s23, 0
      %p120 = por %p118, %p119
      %p121 = scmp.le.s32.totalorder 1, %s17
      %p122 = scmp.lt.s32.totalorder %s17, 3
      %p123 = pnand %p121, %p122
      %p124 = pneg %p123
      // Predicated region
      $region9: #{tpu_custom_call.1} parent=5 // pred_check
        _
      $region10: #{tpu_custom_call.1} parent=5 // pred_check_branch
        %126 = sbr.rel (%p123) target = $region12
      $region11: #{tpu_custom_call.1} parent=5 // pred_region
        %s127 = ssub.s32 %s17, 1
      $region12: #{tpu_custom_call.1} parent=5 // pred_fallthru
        _
      %p128 = scmp.lt.s32.totalorder %s17, 2
      // Predicated region
      $region13: #{tpu_custom_call.1} parent=5 // pred_check
        %p129 = pneg %p128
      $region14: #{tpu_custom_call.1} parent=5 // pred_check_branch
        %131 = sbr.rel (%p129) target = $region16
      $region15: #{tpu_custom_call.1} parent=5 // pred_region
        // Predicated region
        $region17: #{tpu_custom_call.1} parent=15 // pred_check
          %p132 = pneg %p51
        $region18: #{tpu_custom_call.1} parent=15 // pred_check_branch
          %134 = sbr.rel (%p132) target = $region20
        $region19: #{tpu_custom_call.1} parent=15 // pred_region
          %s135 = sand.u32 %s41, 1
          %s136 = scalar_lea.sflag [#allocation3], %s135
          %s137 = sand.u32 %s41, 1
          %s138 = smul.addr %s137, 4
          %s139 = scalar_lea.vmem [#allocation2], %s138
          %141 = vsyncadd %s136, 0
          %s142 = smul.addr %s24, 2
          %s143 = sadd.s32 %s25, %s142
          %s144 = smul.addr %s143, 2
          %s145 = scalar_lea.hbm %s0, %s144
          %s146 = sshll.u32 %s145, 4
          %s147 = int_to_ptr.hbm [resolvable:$true] %s146
          %s148 = sshll.u32 %s139, 4
          %s149 = int_to_ptr.vmem [resolvable:$true] %s148
          %154 = dma.hbm_to_vmem [thread:$0]  %s147, 64, %s149, %s136, 32, 32, 2
        $region20: #{tpu_custom_call.1} parent=15 // pred_fallthru
          _
        // Predicated region
        $region21: #{tpu_custom_call.1} parent=15 // pred_check
          %p155 = pneg %p79
        $region22: #{tpu_custom_call.1} parent=15 // pred_check_branch
          %157 = sbr.rel (%p155) target = $region24
        $region23: #{tpu_custom_call.1} parent=15 // pred_region
          %s158 = sand.u32 %s69, 1
          %s159 = scalar_lea.sflag [#allocation6], %s158
          %s160 = sand.u32 %s69, 1
          %s161 = smul.addr %s160, 6
          %s162 = scalar_lea.vmem [#allocation5], %s161
          %164 = vsyncadd %s159, 0
          %s165 = smul.addr %s24, 3
          %s166 = sadd.s32 %s25, %s165
          %s167 = smul.addr %s166, 2
          %s168 = scalar_lea.hbm %s1, %s167
          %s169 = sshll.u32 %s168, 4
          %s170 = int_to_ptr.hbm [resolvable:$true] %s169
          %s171 = sshll.u32 %s162, 4
          %s172 = int_to_ptr.vmem [resolvable:$true] %s171
          %177 = dma.hbm_to_vmem [thread:$0]  %s170, 96, %s172, %s159, 32, 32, 2
        $region24: #{tpu_custom_call.1} parent=15 // pred_fallthru
          _
      $region16: #{tpu_custom_call.1} parent=5 // pred_fallthru
        _
      %p178 = scmp.le.s32.totalorder 1, %s17
      %p179 = scmp.lt.s32.totalorder %s17, 3
      %p180 = pnand %p178, %p179
      %p181 = pneg %p180
      // Predicated region
      $region25: #{tpu_custom_call.1} parent=5 // pred_check
        _
      $region26: #{tpu_custom_call.1} parent=5 // pred_check_branch
        %183 = sbr.rel (%p180) target = $region28
      $region27: #{tpu_custom_call.1} parent=5 // pred_region
        %s184 = ssub.s32 %s17, 1
        %s185 = sand.u32 %s44, 1
        %s186 = scalar_lea.sflag [#allocation3], %s185
        %s187 = sand.u32 %s44, 1
        %s188 = smul.addr %s187, 4
        %s189 = scalar_lea.vmem [#allocation2], %s188
        // Predicated region
        $region29: #{tpu_custom_call.1} parent=27 // pred_check
          %p190 = pneg %p57
        $region30: #{tpu_custom_call.1} parent=27 // pred_check_branch
          %192 = sbr.rel (%p190) target = $region32
        $region31: #{tpu_custom_call.1} parent=27 // pred_region
          %194 = dma.done %s186, 64
        $region32: #{tpu_custom_call.1} parent=27 // pred_fallthru
          _
        %s195 = sand.u32 %s72, 1
        %s196 = scalar_lea.sflag [#allocation6], %s195
        %s197 = sand.u32 %s72, 1
        %s198 = smul.addr %s197, 6
        %s199 = scalar_lea.vmem [#allocation5], %s198
        // Predicated region
        $region33: #{tpu_custom_call.1} parent=27 // pred_check
          %p200 = pneg %p85
        $region34: #{tpu_custom_call.1} parent=27 // pred_check_branch
          %202 = sbr.rel (%p200) target = $region36
        $region35: #{tpu_custom_call.1} parent=27 // pred_region
          %204 = dma.done %s196, 96
        $region36: #{tpu_custom_call.1} parent=27 // pred_fallthru
          _
        %s205 = sand.u32 %s44, 1
        %s206 = scalar_lea.sflag [#allocation3], %s205
        %s207 = sand.u32 %s44, 1
        %s208 = smul.addr %s207, 4
        %s209 = scalar_lea.vmem [#allocation2], %s208
        %p210 = pneg %p57
        %p211 = pneg %p54
        %s212 = sand.u32 %s72, 1
        %s213 = scalar_lea.sflag [#allocation6], %s212
        %s214 = sand.u32 %s72, 1
        %s215 = smul.addr %s214, 6
        %s216 = scalar_lea.vmem [#allocation5], %s215
        %p217 = pneg %p85
        %p218 = pneg %p82
        %p219 = pneg %p113
        %p220 = pneg %p110
        %s221 = sand.u32 %s100, 1
        %s222 = scalar_lea.sflag [#allocation4], %s221
        %s223 = sand.u32 %s100, 1
        %s224 = smul.addr %s223, 16
        %s225 = scalar_lea.vmem [#allocation7], %s224
        %s226 = sadd.s32 %s26, %s27
        %v227 = vld [vmem:[%s189] sm:$0x3]
        %s228 = scalar_lea.vmem %s189, 2 [#allocation2]
        %v229 = vld [vmem:[%s228] sm:$0x3]
        %v230 = vld [vmem:[%s199] sm:$0x3]
        %s231 = scalar_lea.vmem %s199, 2 [#allocation5]
        %v232 = vld [vmem:[%s231] sm:$0x3]
        %s233 = scalar_lea.vmem %s199, 4 [#allocation5]
        %v234 = vld [vmem:[%s233] sm:$0x3]
        %v235 = vsub.f32 %v227, %v230
        %v236 = vadd.f32 %v230, 1e-10
        %v237 = vrcp.pop %v236
        %v238 = vmul.f32 %v236, %v237
        %v239 = vsub.f32 1.0, %v238
        %v240 = vmul.f32 %v237, %v239
        %v241 = vadd.f32 %v237, %v240
        %vm242 = vweird.f32 %v236
        %vm243 = vweird.f32 %v237
        %vm244 = vmor %vm242, %vm243
        %v245 = vsel %vm244, %v237, %v241
        %v246 = vand.u32 2147483647, %v236
        %vm247 = vcmp.eq.f32.partialorder %v246, 8.507059e+37
        %v248 = vand.u32 %v236, 2147483648
        %v249 = vor.u32 1.1754944e-38, %v248
        %v250 = vsel %vm247, %v249, %v245
        %v251 = vmul.f32 %v235, %v250
        %v252 = vsub.f32 %v229, %v232
        %v253 = vadd.f32 %v232, 1e-10
        %v254 = vrcp.pop %v253
        %v255 = vmul.f32 %v253, %v254
        %v256 = vsub.f32 1.0, %v255
        %v257 = vmul.f32 %v254, %v256
        %v258 = vadd.f32 %v254, %v257
        %vm259 = vweird.f32 %v253
        %vm260 = vweird.f32 %v254
        %vm261 = vmor %vm259, %vm260
        %v262 = vsel %vm261, %v254, %v258
        %v263 = vand.u32 2147483647, %v253
        %vm264 = vcmp.eq.f32.partialorder %v263, 8.507059e+37
        %v265 = vand.u32 %v253, 2147483648
        %v266 = vor.u32 1.1754944e-38, %v265
        %v267 = vsel %vm264, %v266, %v262
        %v268 = vmul.f32 %v252, %v267
        %v269 = vand.u32 2147483647, %v251
        %v270 = vand.u32 2147483647, %v268
        %v271 = vadd.f32 %v269, %v270
        %v272 = vmul.f32 %v234, %v271
        %vm273 = vcmask 1041408
        %v274 = vsel %vm273, %v272, 0.0
        %275 = vadd.xlane.f32.xlu0 %v274
        %v276 = vpop.xlane.xlu0 %275
        %v277 = vrot.slane %v276, 4
        %v278 = vadd.f32 %v276, %v277
        %v279 = vrot.slane %v278, 2
        %v280 = vadd.f32 %v278, %v279
        %v281 = vrot.slane %v280, 1
        %v282 = vadd.f32 %v280, %v281
        %s283 = vtos %v282
        %v284 = vsel %vm273, %v234, 0.0
        %285 = vadd.xlane.f32.xlu0 %v284
        %v286 = vpop.xlane.xlu0 %285
        %v287 = vrot.slane %v286, 4
        %v288 = vadd.f32 %v286, %v287
        %v289 = vrot.slane %v288, 2
        %v290 = vadd.f32 %v288, %v289
        %v291 = vrot.slane %v290, 1
        %v292 = vadd.f32 %v290, %v291
        %s293 = vtos %v292
        %v294 = vstv %s283
        %295 = vst [vmem:[%s225] sm:$0xff] %v294
        %v296 = vstv %s293
        %s297 = scalar_lea.vmem %s225, 8 [#allocation7]
        %298 = vst [vmem:[%s297] sm:$0xff] %v296
        %s299 = sand.u32 %s100, 1
        %s300 = scalar_lea.sflag [#allocation4], %s299
        %s301 = sand.u32 %s100, 1
        %s302 = smul.addr %s301, 16
        %s303 = scalar_lea.vmem [#allocation7], %s302
        // Predicated region
        $region37: #{tpu_custom_call.1} parent=27 // pred_check
          %p304 = pneg %p110
        $region38: #{tpu_custom_call.1} parent=27 // pred_check_branch
          %306 = sbr.rel (%p304) target = $region40
        $region39: #{tpu_custom_call.1} parent=27 // pred_region
          %s307 = sadd.s32 %s26, %s27
          %309 = vsyncadd %s300, 0
          %s310 = smul.addr %s307, 2
          %s311 = smul.addr %s310, 8
          %s312 = scalar_lea.hbm %s2, %s311
          %s313 = sshll.u32 %s303, 4
          %s314 = int_to_ptr.vmem [resolvable:$true] %s313
          %s315 = sshll.u32 %s312, 4
          %s316 = int_to_ptr.hbm [resolvable:$true] %s315
          %321 = dma.vmem_to_hbm [thread:$0]  %s314, 256, %s316, %s300, 128, 128, 8
        $region40: #{tpu_custom_call.1} parent=27 // pred_fallthru
          _
      $region28: #{tpu_custom_call.1} parent=5 // pred_fallthru
        _
      %p322 = scmp.le.s32.totalorder 2, %s17
      // Predicated region
      $region41: #{tpu_custom_call.1} parent=5 // pred_check
        %p323 = pneg %p322
      $region42: #{tpu_custom_call.1} parent=5 // pred_check_branch
        %325 = sbr.rel (%p323) target = $region44
      $region43: #{tpu_custom_call.1} parent=5 // pred_region
        %s326 = ssub.s32 %s17, 2
        // Predicated region
        $region45: #{tpu_custom_call.1} parent=43 // pred_check
          %p327 = pneg %p116
        $region46: #{tpu_custom_call.1} parent=43 // pred_check_branch
          %329 = sbr.rel (%p327) target = $region48
        $region47: #{tpu_custom_call.1} parent=43 // pred_region
          %s330 = sand.u32 %s101, 1
          %s331 = scalar_lea.sflag [#allocation4], %s330
          %s332 = sand.u32 %s101, 1
          %s333 = smul.addr %s332, 16
          %s334 = scalar_lea.vmem [#allocation7], %s333
          %336 = dma.done %s331, 256
        $region48: #{tpu_custom_call.1} parent=43 // pred_fallthru
          _
      $region44: #{tpu_custom_call.1} parent=5 // pred_fallthru
        _
    $region6: #{tpu_custom_call.1} parent=1 // loop_footer
      %s21 = sadd.s32 1, %s17
    $region7: #{tpu_custom_call.1} parent=1 // loop_footer_branch
      %16 = sbr.rel target = $region3
    $region8: #{tpu_custom_call.1} parent=1 // loop_exit
      _
    %337 = vsyncpa [#allocation3], 1
    %s338 = scalar_lea.sflag [#allocation3], 1
    %339 = vsyncpa %s338, 1
    %340 = vsyncpa [#allocation6], 1
    %s341 = scalar_lea.sflag [#allocation6], 1
    %342 = vsyncpa %s341, 1
    %343 = vsyncpa [#allocation4], 1
    %s344 = scalar_lea.sflag [#allocation4], 1
    %345 = vsyncpa %s344, 1

</llo_original>
